<compile_context>
chip_gen: v5e
topology: v5e:2x2
jax: 0.10.0
libtpu: 0.0.40
codegen_flags: <defaults>
</compile_context>

<pallas_src>
import jax
import jax.numpy as jnp
from jax import lax
from jax.experimental import pallas as pl
from jax.experimental.pallas import tpu as pltpu


def pandown_kernel(colw1_ref, b1_ref, colw2a_ref, colw2b_ref, b2_ref,
                   x_ref, o1_ref, o2_ref):
    # x_ref is a (tile_m2, 2*W) slab of the row-paired input view: local row m holds the
    # two original image rows (2m, 2m+1) concatenated along the lane dimension.
    x = x_ref[...]

    # ---- conv_down1 (kernel=2, stride=2): one dense MXU matmul ----
    o1 = jnp.dot(x, colw1_ref[...], preferred_element_type=jnp.float32) + b1_ref[0]
    o1_ref[...] = o1.astype(o1_ref.dtype)

    # ---- conv_down2 (kernel=4, stride=4): even paired-rows carry kernel rows 0-1,
    # odd paired-rows carry kernel rows 2-3 ----
    mo2 = o2_ref.shape[0]
    x_even = x_ref[pl.ds(0, mo2, stride=2), :]
    x_odd = x_ref[pl.ds(1, mo2, stride=2), :]
    o2 = (jnp.dot(x_even, colw2a_ref[...], preferred_element_type=jnp.float32)
          + jnp.dot(x_odd, colw2b_ref[...], preferred_element_type=jnp.float32)
          + b2_ref[0])
    o2_ref[...] = o2.astype(o2_ref.dtype)


def _fold_rows(w_rows, kc, W):
    """w_rows: (nr, kc) kernel-row group.  Returns F of shape (nr*W, W//kc) such that
    (xp @ F)[i, j] = sum_{r, q} w_rows[r, q] * xp[i, r*W + kc*j + q], i.e. the column
    decimation + tap weighting of a stride-kc 'valid' conv, folded into a dense matmul."""
    nr = w_rows.shape[0]
    Wo = W // kc
    c = jnp.arange(W)
    j = jnp.arange(Wo)
    q = c[:, None] - kc * j[None, :]                      # (W, Wo)
    valid = (q >= 0) & (q < kc)
    qc = jnp.clip(q, 0, kc - 1)
    blocks = [jnp.where(valid, w_rows[r][qc], 0.0) for r in range(nr)]   # each (W, Wo)
    return jnp.concatenate(blocks, axis=0).astype(jnp.float32)            # (nr*W, Wo)


def _pick_tile_m2(M2, W2):
    """Largest row tile that divides M2, keeps the f32 input tile around <= 4 MiB, and is
    a multiple of 16 (so the conv2 output block keeps an 8-aligned sublane dim)."""
    cap = max(16, ((4 << 20) // (4 * max(W2, 1))) // 16 * 16)
    if M2 <= cap:
        return M2
    start = min(cap, (M2 // 16) * 16)
    for t in range(start, 15, -16):
        if M2 % t == 0:
            return t
    t = min(cap, M2)
    t -= t % 2
    while t >= 2:
        if M2 % t == 0:
            return t
        t -= 2
    return M2


def _vmem_limit_bytes(tile_m2, W2, Wo1, Wo2):
    f32 = 4
    lane = lambda d: ((max(d, 1) + 127) // 128) * 128
    sub = lambda d: ((max(d, 1) + 7) // 8) * 8
    x_b = 2 * sub(tile_m2) * lane(W2) * f32                                        # input (x2 buf)
    o_b = 2 * (sub(tile_m2) * lane(Wo1) + sub(tile_m2 // 2) * lane(Wo2)) * f32     # outputs
    w_b = 2 * (sub(W2) * lane(Wo1) + 2 * sub(W2) * lane(Wo2)) * f32                # folded weights
    est = x_b + o_b + w_b
    return int(min(max(est + (8 << 20), 32 << 20), 64 << 20))


def pandown_forward(pan, w1, b1, w2, b2):
    """pan: (N, 1, H, W) f32.  Returns (out1, out2) in NCHW, matching the torch module."""
    N, C, H, W = pan.shape
    assert C == 1 and H % 4 == 0 and W % 4 == 0
    M2 = (N * H) // 2
    W2 = 2 * W
    # Row-paired view: identical row-major memory layout, so this reshape is free.
    x2 = pan.reshape(M2, W2).astype(jnp.float32)

    w1 = jnp.asarray(w1, jnp.float32).reshape(2, 2)
    w2 = jnp.asarray(w2, jnp.float32).reshape(4, 4)
    colw1 = _fold_rows(w1, 2, W)              # (2W, W/2)
    colw2a = _fold_rows(w2[0:2], 4, W)        # (2W, W/4)  -- kernel rows 0-1
    colw2b = _fold_rows(w2[2:4], 4, W)        # (2W, W/4)  -- kernel rows 2-3
    b1v = jnp.asarray(b1, jnp.float32).reshape((1,))
    b2v = jnp.asarray(b2, jnp.float32).reshape((1,))

    Wo1, Wo2 = W // 2, W // 4
    tile_m2 = _pick_tile_m2(M2, W2)
    grid = (M2 // tile_m2,)

    smem_spec = pl.BlockSpec(memory_space=pltpu.MemorySpace.SMEM)

    out1, out2 = pl.pallas_call(
        pandown_kernel,
        out_shape=(jax.ShapeDtypeStruct((M2, Wo1), jnp.float32),
                   jax.ShapeDtypeStruct((M2 // 2, Wo2), jnp.float32)),
        grid_spec=pltpu.PrefetchScalarGridSpec(
            num_scalar_prefetch=0,
            grid=grid,
            in_specs=[
                pl.BlockSpec((W2, Wo1), lambda m: (0, 0)),     # constant: DMA'd once
                smem_spec,
                pl.BlockSpec((W2, Wo2), lambda m: (0, 0)),     # constant: DMA'd once
                pl.BlockSpec((W2, Wo2), lambda m: (0, 0)),     # constant: DMA'd once
                smem_spec,
                pl.BlockSpec((tile_m2, W2), lambda m: (m, 0)),  # streamed input slab
            ],
            out_specs=[
                pl.BlockSpec((tile_m2, Wo1), lambda m: (m, 0)),
                pl.BlockSpec((tile_m2 // 2, Wo2), lambda m: (m, 0)),
            ],
        ),
        compiler_params=pltpu.CompilerParams(
            dimension_semantics=("parallel",),
            vmem_limit_bytes=_vmem_limit_bytes(tile_m2, W2, Wo1, Wo2),
        ),
    )(colw1, b1v, colw2a, colw2b, b2v, x2)

    return (out1.reshape(N, 1, H // 2, Wo1),
            out2.reshape(N, 1, H // 4, Wo2))


def _reference(pan, w1, b1, w2, b2):
    def conv(x, w, b, k):
        y = lax.conv_general_dilated(
            x, jnp.asarray(w, jnp.float32).reshape(1, 1, k, k),
            window_strides=(k, k), padding="VALID",
            dimension_numbers=("NCHW", "OIHW", "NCHW"))
        return y + b
    return conv(pan, w1, b1, 2), conv(pan, w2, b2, 4)


if __name__ == "__main__":
    key = jax.random.PRNGKey(0)
    k_x, k_w1, k_w2 = jax.random.split(key, 3)

    # Deterministic synthetic parameters (shapes from nn.Conv2d(1,1,k,stride=k)):
    # small-scale stand-in for the variance-scaling truncated-normal init; nonzero biases
    # to exercise the bias path.
    w1 = jax.random.normal(k_w1, (2, 2), jnp.float32) * 0.1
    b1 = jnp.float32(0.1)
    w2 = jax.random.normal(k_w2, (4, 4), jnp.float32) * 0.05
    b2 = jnp.float32(-0.05)

    pan = jax.random.normal(k_x, (2, 1, 16, 16), jnp.float32)   # NCHW, C=1

    out1, out2 = pandown_forward(pan, w1, b1, w2, b2)
    out1, out2 = jax.block_until_ready(out1), jax.block_until_ready(out2)

    ref1, ref2 = _reference(pan, w1, b1, w2, b2)
    assert out1.shape == (2, 1, 8, 8) and out2.shape == (2, 1, 4, 4)
    assert jnp.allclose(out1, ref1, atol=1e-5, rtol=1e-5)
    assert jnp.allclose(out2, ref2, atol=1e-5, rtol=1e-5)

    print("KERNEL_OK")
</pallas_src>

<mosaic_0001>
module attributes {stable_mosaic.version = 11 : i64} {
  func.func @pandown_kernel(%arg0: i32, %arg1: memref<32x8xf32, #tpu.memory_space<vmem>>, %arg2: memref<1xf32, #tpu.memory_space<smem>>, %arg3: memref<32x4xf32, #tpu.memory_space<vmem>>, %arg4: memref<32x4xf32, #tpu.memory_space<vmem>>, %arg5: memref<1xf32, #tpu.memory_space<smem>>, %arg6: memref<16x32xf32, #tpu.memory_space<vmem>>, %arg7: memref<16x8xf32, #tpu.memory_space<vmem>>, %arg8: memref<8x4xf32, #tpu.memory_space<vmem>>) attributes {dimension_semantics = [#tpu.dimension_semantics<parallel>], iteration_bounds = array<i64: 1>, scalar_prefetch = 0 : i64, scratch_operands = 0 : i64, tpu.core_type = #tpu.core_type<tc>, window_params = [{pipeline_mode = #tpu.pipeline_mode<synchronous>, transform_indices = @transform_0, window_bounds = array<i64: 32, 8>}, {transform_indices = @transform_1, window_bounds = array<i64: 1>}, {pipeline_mode = #tpu.pipeline_mode<synchronous>, transform_indices = @transform_2, window_bounds = array<i64: 32, 4>}, {pipeline_mode = #tpu.pipeline_mode<synchronous>, transform_indices = @transform_3, window_bounds = array<i64: 32, 4>}, {transform_indices = @transform_4, window_bounds = array<i64: 1>}, {transform_indices = @transform_5, window_bounds = array<i64: 16, 32>}, {transform_indices = @transform_6, window_bounds = array<i64: 16, 8>}, {transform_indices = @transform_7, window_bounds = array<i64: 8, 4>}]} {
    %c0 = arith.constant 0 : index
    %c0_0 = arith.constant 0 : index
    %0 = vector.load %arg6[%c0, %c0_0] : memref<16x32xf32, #tpu.memory_space<vmem>>, vector<16x32xf32>
    %c0_1 = arith.constant 0 : index
    %c0_2 = arith.constant 0 : index
    %1 = vector.load %arg1[%c0_1, %c0_2] : memref<32x8xf32, #tpu.memory_space<vmem>>, vector<32x8xf32>
    %cst = arith.constant dense<0.000000e+00> : vector<16x8xf32>
    %2 = tpu.matmul %0, %1, %cst {dimension_numbers = #tpu.dot_dimension_numbers<[1], [0], [0], [1], [0, 0, 1, 1], [], []>} : vector<16x32xf32>, vector<32x8xf32>, vector<16x8xf32> -> vector<16x8xf32>
    %c0_3 = arith.constant 0 : index
    %3 = memref.load %arg2[%c0_3] : memref<1xf32, #tpu.memory_space<smem>>
    %4 = vector.broadcast %3 : f32 to vector<16x8xf32>
    %5 = arith.addf %2, %4 : vector<16x8xf32>
    %c0_4 = arith.constant 0 : index
    %c0_5 = arith.constant 0 : index
    %6 = vector.load %arg7[%c0_4, %c0_5] : memref<16x8xf32, #tpu.memory_space<vmem>>, vector<16x8xf32>
    tpu.vector_store %arg7[%c0_4, %c0_5], %5 {strides = array<i32>} : memref<16x8xf32, #tpu.memory_space<vmem>>, vector<16x8xf32>,
    %c0_6 = arith.constant 0 : index
    %c0_7 = arith.constant 0 : index
    %7 = tpu.strided_load %arg6[%c0_6, %c0_7] {strides = array<i32: 2, 1>} : memref<16x32xf32, #tpu.memory_space<vmem>>, vector<8x32xf32>
    %c1 = arith.constant 1 : index
    %c0_8 = arith.constant 0 : index
    %8 = tpu.strided_load %arg6[%c1, %c0_8] {strides = array<i32: 2, 1>} : memref<16x32xf32, #tpu.memory_space<vmem>>, vector<8x32xf32>
    %c0_9 = arith.constant 0 : index
    %c0_10 = arith.constant 0 : index
    %9 = vector.load %arg3[%c0_9, %c0_10] : memref<32x4xf32, #tpu.memory_space<vmem>>, vector<32x4xf32>
    %cst_11 = arith.constant dense<0.000000e+00> : vector<8x4xf32>
    %10 = tpu.matmul %7, %9, %cst_11 {dimension_numbers = #tpu.dot_dimension_numbers<[1], [0], [0], [1], [0, 0, 1, 1], [], []>} : vector<8x32xf32>, vector<32x4xf32>, vector<8x4xf32> -> vector<8x4xf32>
    %c0_12 = arith.constant 0 : index
    %c0_13 = arith.constant 0 : index
    %11 = vector.load %arg4[%c0_12, %c0_13] : memref<32x4xf32, #tpu.memory_space<vmem>>, vector<32x4xf32>
    %cst_14 = arith.constant dense<0.000000e+00> : vector<8x4xf32>
    %12 = tpu.matmul %8, %11, %cst_14 {dimension_numbers = #tpu.dot_dimension_numbers<[1], [0], [0], [1], [0, 0, 1, 1], [], []>} : vector<8x32xf32>, vector<32x4xf32>, vector<8x4xf32> -> vector<8x4xf32>
    %13 = arith.addf %10, %12 : vector<8x4xf32>
    %c0_15 = arith.constant 0 : index
    %14 = memref.load %arg5[%c0_15] : memref<1xf32, #tpu.memory_space<smem>>
    %15 = vector.broadcast %14 : f32 to vector<8x4xf32>
    %16 = arith.addf %13, %15 : vector<8x4xf32>
    %c0_16 = arith.constant 0 : index
    %c0_17 = arith.constant 0 : index
    %17 = vector.load %arg8[%c0_16, %c0_17] : memref<8x4xf32, #tpu.memory_space<vmem>>, vector<8x4xf32>
    tpu.vector_store %arg8[%c0_16, %c0_17], %16 {strides = array<i32>} : memref<8x4xf32, #tpu.memory_space<vmem>>, vector<8x4xf32>,
    return
  }
  func.func @transform_0(%arg0: i32) -> (i32, i32) {
    %c0_i32 = arith.constant 0 : i32
    %c0_i32_0 = arith.constant 0 : i32
    %c0_i32_1 = arith.constant 0 : i32
    return %c0_i32, %c0_i32_0 : i32, i32
  }
  func.func @transform_1(%arg0: i32) -> i32 {
    %c0_i32 = arith.constant 0 : i32
    %c0_i32_0 = arith.constant 0 : i32
    return %c0_i32 : i32
  }
  func.func @transform_2(%arg0: i32) -> (i32, i32) {
    %c0_i32 = arith.constant 0 : i32
    %c0_i32_0 = arith.constant 0 : i32
    %c0_i32_1 = arith.constant 0 : i32
    return %c0_i32, %c0_i32_0 : i32, i32
  }
  func.func @transform_3(%arg0: i32) -> (i32, i32) {
    %c0_i32 = arith.constant 0 : i32
    %c0_i32_0 = arith.constant 0 : i32
    %c0_i32_1 = arith.constant 0 : i32
    return %c0_i32, %c0_i32_0 : i32, i32
  }
  func.func @transform_4(%arg0: i32) -> i32 {
    %c0_i32 = arith.constant 0 : i32
    %c0_i32_0 = arith.constant 0 : i32
    return %c0_i32 : i32
  }
  func.func @transform_5(%arg0: i32) -> (i32, i32) {
    %c0_i32 = arith.constant 0 : i32
    %c0_i32_0 = arith.constant 0 : i32
    return %arg0, %c0_i32 : i32, i32
  }
  func.func @transform_6(%arg0: i32) -> (i32, i32) {
    %c0_i32 = arith.constant 0 : i32
    %c0_i32_0 = arith.constant 0 : i32
    return %arg0, %c0_i32 : i32, i32
  }
  func.func @transform_7(%arg0: i32) -> (i32, i32) {
    %c0_i32 = arith.constant 0 : i32
    %c0_i32_0 = arith.constant 0 : i32
    return %arg0, %c0_i32 : i32, i32
  }
}

</mosaic_0001>

<llo_original>
// kernel: tpu_custom_call.1
$region0: #{tpu_custom_call.1}
  #allocation0 [shape = 'u32[]', space=smem, size = 0x4, offset = 0x4, fixed_abs, tag = 'smem constant byte address 0x4 - core index']
  #allocation1 [shape = 'u32[72,128]{1,0:T(1,128)}', space=vmem, size = 0x9000, scoped, tag = 'internal scratch']
  #allocation2 [shape = 'f32[1]{0:T(128)S(6)}', space=smem, size = 0x200, scoped, tag = 'scoped memory for tpu_custom_call.1']
  #allocation3 [shape = 'f32[1]{0:T(128)S(6)}', space=smem, size = 0x200, scoped, tag = 'scoped memory for tpu_custom_call.1']
  %s0 = inlined_call_operand.vmem [shape: f32[32,8], index: 0, kind: input, shape index: {}]
  %s1 = inlined_call_operand.<no memory space> [shape: f32[1], index: 1, kind: input, shape index: {}]
  %s2 = inlined_call_operand.vmem [shape: f32[32,4], index: 2, kind: input, shape index: {}]
  %s3 = inlined_call_operand.vmem [shape: f32[32,4], index: 3, kind: input, shape index: {}]
  %s4 = inlined_call_operand.<no memory space> [shape: f32[1], index: 4, kind: input, shape index: {}]
  %s5 = inlined_call_operand.vmem [shape: f32[16,32], index: 5, kind: input, shape index: {}]
  %s6 = inlined_call_operand.vmem [shape: f32[16,8], index: 6, kind: output, shape index: {0}]
  %s7 = inlined_call_operand.vmem [shape: f32[8,4], index: 7, kind: output, shape index: {1}]
  %8 = xla_tuple %s6, %s7
  %s9 = sld [smem:[#allocation0]]
  $region42: #{tpu_custom_call.1} parent=0
    _
  %s11 = ssub.s32 1, %s9
  %s12 = scalar_select 0, %s11, %s9
  %13 = sst [smem:[#allocation2]] %s1
  %14 = sst [smem:[#allocation3]] %s4
  // Predicated region
  $region2: #{tpu_custom_call.1} parent=0 // pred_check
    _
  $region3: #{tpu_custom_call.1} parent=0 // pred_check_branch
    %16 = sbr.rel (0) target = $region5
  $region4: #{tpu_custom_call.1} parent=0 // pred_region
    _
  $region5: #{tpu_custom_call.1} parent=0 // pred_fallthru
    _
  // Predicated region
  $region6: #{tpu_custom_call.1} parent=0 // pred_check
    _
  $region7: #{tpu_custom_call.1} parent=0 // pred_check_branch
    %18 = sbr.rel (0) target = $region9
  $region8: #{tpu_custom_call.1} parent=0 // pred_region
    _
  $region9: #{tpu_custom_call.1} parent=0 // pred_fallthru
    _
  // Predicated region
  $region10: #{tpu_custom_call.1} parent=0 // pred_check
    _
  $region11: #{tpu_custom_call.1} parent=0 // pred_check_branch
    %20 = sbr.rel (0) target = $region13
  $region12: #{tpu_custom_call.1} parent=0 // pred_region
    _
  $region13: #{tpu_custom_call.1} parent=0 // pred_fallthru
    _
  // Predicated region
  $region14: #{tpu_custom_call.1} parent=0 // pred_check
    _
  $region15: #{tpu_custom_call.1} parent=0 // pred_check_branch
    %22 = sbr.rel (0) target = $region17
  $region16: #{tpu_custom_call.1} parent=0 // pred_region
    _
  $region17: #{tpu_custom_call.1} parent=0 // pred_fallthru
    _
  // Predicated region
  $region18: #{tpu_custom_call.1} parent=0 // pred_check
    _
  $region19: #{tpu_custom_call.1} parent=0 // pred_check_branch
    %24 = sbr.rel (0) target = $region21
  $region20: #{tpu_custom_call.1} parent=0 // pred_region
    _
  $region21: #{tpu_custom_call.1} parent=0 // pred_fallthru
    _
  // Predicated region
  $region22: #{tpu_custom_call.1} parent=0 // pred_check
    _
  $region23: #{tpu_custom_call.1} parent=0 // pred_check_branch
    %26 = sbr.rel (0) target = $region25
  $region24: #{tpu_custom_call.1} parent=0 // pred_region
    _
  $region25: #{tpu_custom_call.1} parent=0 // pred_fallthru
    _
  %v27 = vld [vmem:[%s5] sm:$0xff]
  %v28 = vld [vmem:[%s5 + $0x8] sm:$0xff]
  %v29 = vld [vmem:[%s0] sm:$0xff]
  %v30 = vld [vmem:[%s0 + $0x8] sm:$0xff]
  %v31 = vld [vmem:[%s0 + $0x10] sm:$0xff]
  %v32 = vld [vmem:[%s0 + $0x18] sm:$0xff]
  %s33 = sld [smem:[#allocation2]]
  %v34 = vstv %s33
  %vm35 = vcmask 261120
  %v37 = vsel %vm35, %v27, 0
  %v40 = vsel %vm35, %v28, 0
  %42 = vmatpush.msra.mxu0 0.0
  %43 = vmatpush.msra.mxu0 0.0
  %44 = vmatpush.msra.mxu0 0.0
  %45 = vmatpush.msra.mxu0 0.0
  %46 = vmatpush.msra.mxu0 0.0
  %47 = vmatpush.msra.mxu0 0.0
  %48 = vmatpush.msra.mxu0 0.0
  %49 = vmatpush.msra.mxu0 0.0
  %50 = vmatpush.msra.mxu0 0.0
  %51 = vmatpush.msra.mxu0 0.0
  %52 = vmatpush.msra.mxu0 0.0
  %53 = vmatpush.msra.mxu0 0.0
  %54 = vmatpush.msra.mxu0 %v32
  %55 = vmatpush.msra.mxu0 %v31
  %56 = vmatpush.msra.mxu0 %v30
  %57 = vmatpush.msra.mxu0 %v29
  %58 = vmatmul.f32.gmra.mxu0 %v37
  %v59 = vpop.f32.mrf.mxu0
  %v60 = vadd.f32 %v34, %v59
  %61 = vmatmul.f32.gmra.mxu0 %v40
  %v62 = vpop.f32.mrf.mxu0
  %v63 = vadd.f32 %v34, %v62
  %64 = vdwg.mxu0
  %vm65 = vcmask 64512
  %66 = vst.msk [vmem:[%s6] sm:$0xff] %vm65, %v60
  %67 = vst.msk [vmem:[%s6 + $0x8] sm:$0xff] %vm65, %v63
  %v68 = vld [vmem:[%s5] ss:$2 sm:$0xff]
  %s69 = scalar_lea.vmem %s5, 1
  %v70 = vld [vmem:[%s69] ss:$2 sm:$0xff]
  %v71 = vld [vmem:[%s2] sm:$0xff]
  %v72 = vld [vmem:[%s2 + $0x8] sm:$0xff]
  %v73 = vld [vmem:[%s2 + $0x10] sm:$0xff]
  %v74 = vld [vmem:[%s2 + $0x18] sm:$0xff]
  %v75 = vld [vmem:[%s3] sm:$0xff]
  %v76 = vld [vmem:[%s3 + $0x8] sm:$0xff]
  %v77 = vld [vmem:[%s3 + $0x10] sm:$0xff]
  %v78 = vld [vmem:[%s3 + $0x18] sm:$0xff]
  %v80 = vsel %vm35, %v70, 0
  %82 = vmatpush.msra.mxu0 0.0
  %83 = vmatpush.msra.mxu0 0.0
  %84 = vmatpush.msra.mxu0 0.0
  %85 = vmatpush.msra.mxu0 0.0
  %86 = vmatpush.msra.mxu0 0.0
  %87 = vmatpush.msra.mxu0 0.0
  %88 = vmatpush.msra.mxu0 0.0
  %89 = vmatpush.msra.mxu0 0.0
  %90 = vmatpush.msra.mxu0 0.0
  %91 = vmatpush.msra.mxu0 0.0
  %92 = vmatpush.msra.mxu0 0.0
  %93 = vmatpush.msra.mxu0 0.0
  %94 = vmatpush.msra.mxu0 %v78
  %95 = vmatpush.msra.mxu0 %v77
  %96 = vmatpush.msra.mxu0 %v76
  %97 = vmatpush.msra.mxu0 %v75
  %98 = vmatmul.f32.gmra.mxu0 %v80
  %v99 = vpop.f32.mrf.mxu0
  %v100 = vadd.f32 0.0, %v99
  %101 = vdwg.mxu0
  %v103 = vsel %vm35, %v68, 0
  %105 = vmatpush.msra.mxu0 0.0
  %106 = vmatpush.msra.mxu0 0.0
  %107 = vmatpush.msra.mxu0 0.0
  %108 = vmatpush.msra.mxu0 0.0
  %109 = vmatpush.msra.mxu0 0.0
  %110 = vmatpush.msra.mxu0 0.0
  %111 = vmatpush.msra.mxu0 0.0
  %112 = vmatpush.msra.mxu0 0.0
  %113 = vmatpush.msra.mxu0 0.0
  %114 = vmatpush.msra.mxu0 0.0
  %115 = vmatpush.msra.mxu0 0.0
  %116 = vmatpush.msra.mxu0 0.0
  %117 = vmatpush.msra.mxu0 %v74
  %118 = vmatpush.msra.mxu0 %v73
  %119 = vmatpush.msra.mxu0 %v72
  %120 = vmatpush.msra.mxu0 %v71
  %121 = vmatmul.f32.gmra.mxu0 %v103
  %v122 = vpop.f32.mrf.mxu0
  %v123 = vadd.f32 %v100, %v122
  %124 = vdwg.mxu0
  %s125 = sld [smem:[#allocation3]]
  %v126 = vstv %s125
  %v127 = vadd.f32 %v123, %v126
  %vm128 = vcmask 31744
  %129 = vst.msk [vmem:[%s7] sm:$0xff] %vm128, %v127
  // Predicated region
  $region26: #{tpu_custom_call.1} parent=0 // pred_check
    _
  $region27: #{tpu_custom_call.1} parent=0 // pred_check_branch
    %131 = sbr.rel (0) target = $region29
  $region28: #{tpu_custom_call.1} parent=0 // pred_region
    _
  $region29: #{tpu_custom_call.1} parent=0 // pred_fallthru
    _
  // Predicated region
  $region30: #{tpu_custom_call.1} parent=0 // pred_check
    _
  $region31: #{tpu_custom_call.1} parent=0 // pred_check_branch
    %133 = sbr.rel (0) target = $region33
  $region32: #{tpu_custom_call.1} parent=0 // pred_region
    _
  $region33: #{tpu_custom_call.1} parent=0 // pred_fallthru
    _
  // Predicated region
  $region34: #{tpu_custom_call.1} parent=0 // pred_check
    _
  $region35: #{tpu_custom_call.1} parent=0 // pred_check_branch
    %135 = sbr.rel (0) target = $region37
  $region36: #{tpu_custom_call.1} parent=0 // pred_region
    _
  $region37: #{tpu_custom_call.1} parent=0 // pred_fallthru
    _
  // Predicated region
  $region38: #{tpu_custom_call.1} parent=0 // pred_check
    _
  $region39: #{tpu_custom_call.1} parent=0 // pred_check_branch
    %137 = sbr.rel (0) target = $region41
  $region40: #{tpu_custom_call.1} parent=0 // pred_region
    _
  $region41: #{tpu_custom_call.1} parent=0 // pred_fallthru
    _

</llo_original>
